<compile_context>
chip_gen: v7x
topology: tpu7x:2x2x1
jax: 0.10.0
libtpu: 0.0.40
codegen_flags: <defaults>
</compile_context>

<pallas_src>
import functools
import math

import jax
import jax.numpy as jnp
from jax.experimental import pallas as pl
from jax.experimental.pallas import tpu as pltpu

_LANES = 128
_MAX_TILE_ROWS = 1024  # 1024 * 128 * 4B = 0.5 MiB per f32 block


def _scale_kernel(w_ref, o_ref, *, c):
    # w_ref/o_ref: (TILE_R, 128) VMEM tiles. c is a Python float constant,
    # folded at the weight dtype (weak typing keeps bf16 weights in bf16).
    o_ref[...] = w_ref[...] * c


def equalized_weight(weight: jax.Array) -> jax.Array:
    """Return weight * 1/sqrt(prod(shape[1:])), computed in a Pallas kernel."""
    shape = weight.shape
    c = 1.0 / math.sqrt(float(math.prod(shape[1:])))
    n = math.prod(shape)

    # Flatten to a lane-dense 2D slab; pad only the tail remainder.
    rows = pl.cdiv(n, _LANES)
    rows_pad = pl.cdiv(rows, 8) * 8  # sublane multiple of 8
    pad = rows_pad * _LANES - n

    flat = weight.reshape(-1)
    if pad:
        flat = jnp.pad(flat, (0, pad))
    slab = flat.reshape(rows_pad, _LANES)

    # Row tiling: biggest tile up to _MAX_TILE_ROWS (rows_pad is a multiple of 8,
    # so TILE_R is too). Partial last block (if any) is masked by Pallas.
    tile_r = min(rows_pad, _MAX_TILE_ROWS)
    grid = (pl.cdiv(rows_pad, tile_r),)

    out_slab = pl.pallas_call(
        functools.partial(_scale_kernel, c=c),
        out_shape=jax.ShapeDtypeStruct((rows_pad, _LANES), weight.dtype),
        grid=grid,
        in_specs=[pl.BlockSpec((tile_r, _LANES), lambda i: (i, 0))],
        out_specs=pl.BlockSpec((tile_r, _LANES), lambda i: (i, 0)),
        compiler_params=pltpu.CompilerParams(
            dimension_semantics=("parallel",)),
    )(slab)

    if pad:
        return out_slab.reshape(-1)[:n].reshape(shape)
    return out_slab.reshape(shape)


if __name__ == "__main__":
    # Synthetic conv-style weight shape (OIHW), as EqualizedWeight([out, in, k, k]).
    key = jax.random.PRNGKey(0)
    shape = (32, 4, 3, 3)
    weight = jax.random.normal(key, shape, dtype=jnp.float32)

    out = equalized_weight(weight)
    out = jax.block_until_ready(out)

    # Reference check (plain JAX).
    c = 1.0 / math.sqrt(4 * 3 * 3)
    ref = weight * c
    assert out.shape == shape
    assert jnp.allclose(out, ref, atol=1e-6, rtol=1e-6)

    print("KERNEL_OK")
</pallas_src>

<mosaic_0001>
module attributes {stable_mosaic.version = 11 : i64} {
  func.func @_scale_kernel(%arg0: i32, %arg1: memref<16x128xf32, #tpu.memory_space<vmem>>, %arg2: memref<16x128xf32, #tpu.memory_space<vmem>>) attributes {dimension_semantics = [#tpu.dimension_semantics<parallel>], iteration_bounds = array<i64: 1>, scalar_prefetch = 0 : i64, scratch_operands = 0 : i64, tpu.core_type = #tpu.core_type<tc>, window_params = [{transform_indices = @transform_0, window_bounds = array<i64: 16, 128>}, {transform_indices = @transform_1, window_bounds = array<i64: 16, 128>}]} {
    %c0 = arith.constant 0 : index
    %c0_0 = arith.constant 0 : index
    %0 = vector.load %arg1[%c0, %c0_0] : memref<16x128xf32, #tpu.memory_space<vmem>>, vector<16x128xf32>
    %cst = arith.constant 0.166666672 : f32
    %1 = vector.broadcast %cst : f32 to vector<16x128xf32>
    %2 = arith.mulf %0, %1 : vector<16x128xf32>
    %c0_1 = arith.constant 0 : index
    %c0_2 = arith.constant 0 : index
    %3 = vector.load %arg2[%c0_1, %c0_2] : memref<16x128xf32, #tpu.memory_space<vmem>>, vector<16x128xf32>
    tpu.vector_store %arg2[%c0_1, %c0_2], %2 {strides = array<i32>} : memref<16x128xf32, #tpu.memory_space<vmem>>, vector<16x128xf32>,
    return
  }
  func.func @transform_0(%arg0: i32) -> (i32, i32) {
    %c0_i32 = arith.constant 0 : i32
    %c0_i32_0 = arith.constant 0 : i32
    return %arg0, %c0_i32 : i32, i32
  }
  func.func @transform_1(%arg0: i32) -> (i32, i32) {
    %c0_i32 = arith.constant 0 : i32
    %c0_i32_0 = arith.constant 0 : i32
    return %arg0, %c0_i32 : i32, i32
  }
}

</mosaic_0001>

<llo_original>
// kernel: tpu_custom_call.1
$region0: #{tpu_custom_call.1}
  #allocation0 [shape = 'u32[]', space=smem, size = 0x4, offset = 0x4, fixed_abs, tag = 'smem constant byte address 0x4 - core index']
  #allocation1 [shape = 'u32[144,128]{1,0:T(1,128)}', space=vmem, size = 0x12000, scoped, tag = 'internal scratch']
  %s0 = inlined_call_operand.hbm [shape: f32[16,128], index: 0, kind: input, shape index: {}]
  %s1 = inlined_call_operand.hbm [shape: f32[16,128], index: 1, kind: output, shape index: {}]
  %s2 = sld [smem:[#allocation0]]
  $region18: #{tpu_custom_call.1} parent=0
    _
  %s4 = ssub.s32 1, %s2
  %s5 = scalar_select 0, %s4, %s2
  $region1: #{tpu_custom_call.1} parent=0
    #allocation2 [shape = 'u8[8192]{0}', space=vmem, size = 0x2000, scoped, tag = 'input window, operand 0, single buffered']
    #allocation3 [shape = 's32[1]{0}', space=sflag, size = 0x4, scoped, tag = 'scoped memory for tpu_custom_call.1']
    #allocation4 [shape = 's32[1]{0}', space=sflag, size = 0x4, scoped, tag = 'scoped memory for tpu_custom_call.1']
    #allocation5 [shape = 'u8[8192]{0}', space=vmem, size = 0x2000, scoped, tag = 'output window, operand 0, single buffered']
    %6 = vsyncpa [#allocation3], 0
    %7 = vsyncpa [#allocation4], 0
    // Predicated region
    $region2: #{tpu_custom_call.1} parent=1 // pred_check
      _
    $region3: #{tpu_custom_call.1} parent=1 // pred_check_branch
      %9 = sbr.rel (0) target = $region5
    $region4: #{tpu_custom_call.1} parent=1 // pred_region
      %s11 = ssub.s32 256, 256
      %12 = vsyncadd [#allocation3], %s11
      %s13 = sshll.u32 [#allocation2], 4
      %s14 = int_to_ptr.vmem [resolvable:$true] %s13
      %19 = dma.hbm_to_vmem [thread:$0]  %s0, 256, %s14, [#allocation3], 128, 128, 8
    $region5: #{tpu_custom_call.1} parent=1 // pred_fallthru
      _
    // Predicated region
    $region6: #{tpu_custom_call.1} parent=1 // pred_check
      _
    $region7: #{tpu_custom_call.1} parent=1 // pred_check_branch
      %21 = sbr.rel (0) target = $region9
    $region8: #{tpu_custom_call.1} parent=1 // pred_region
      %22 = dma.done [#allocation3], 256
    $region9: #{tpu_custom_call.1} parent=1 // pred_fallthru
      _
    %v23 = vld [vmem:[#allocation2] sm:$0xff]
    %v24 = vld [vmem:[#allocation2 + $0x8] sm:$0xff]
    %v25 = vmul.f32 %v23, 0.16666667
    %v26 = vmul.f32 %v24, 0.16666667
    %27 = vst [vmem:[#allocation5] sm:$0xff] %v25
    %28 = vst [vmem:[#allocation5 + $0x8] sm:$0xff] %v26
    // Predicated region
    $region10: #{tpu_custom_call.1} parent=1 // pred_check
      _
    $region11: #{tpu_custom_call.1} parent=1 // pred_check_branch
      %30 = sbr.rel (0) target = $region13
    $region12: #{tpu_custom_call.1} parent=1 // pred_region
      %s32 = ssub.s32 256, 256
      %33 = vsyncadd [#allocation4], %s32
      %s34 = sshll.u32 [#allocation5], 4
      %s35 = int_to_ptr.vmem [resolvable:$true] %s34
      %40 = dma.vmem_to_hbm [thread:$0]  %s35, 256, %s1, [#allocation4], 128, 128, 8
    $region13: #{tpu_custom_call.1} parent=1 // pred_fallthru
      _
    // Predicated region
    $region14: #{tpu_custom_call.1} parent=1 // pred_check
      _
    $region15: #{tpu_custom_call.1} parent=1 // pred_check_branch
      %42 = sbr.rel (0) target = $region17
    $region16: #{tpu_custom_call.1} parent=1 // pred_region
      %43 = dma.done [#allocation4], 256
    $region17: #{tpu_custom_call.1} parent=1 // pred_fallthru
      _
    %44 = vsyncpa [#allocation3], 1
    %45 = vsyncpa [#allocation4], 1

</llo_original>
